<compile_context>
chip_gen: v7x
topology: tpu7x:2x2x1
jax: 0.10.0
libtpu: 0.0.40
codegen_flags: <defaults>
</compile_context>

<pallas_src>
import jax
import jax.numpy as jnp
from jax.experimental import pallas as pl
from jax.experimental.pallas import tpu as pltpu


# ---------------------------------------------------------------------------
# Kernel
# ---------------------------------------------------------------------------
def _round_kernel(x_ref, o_ref):
    # torch.round == round-half-to-even, which jnp.round also implements.
    # Rounding math is VALU filler at HBM roofline; do not micro-optimize.
    o_ref[...] = jnp.round(x_ref[...])


# ---------------------------------------------------------------------------
# Tiling helpers
# ---------------------------------------------------------------------------
_LANE_CANDIDATES = (1024, 512, 256, 128)   # wide, lane-dense last dims
_TARGET_BLOCK_BYTES = 2 << 20              # ~2 MiB/block -> ~8 MiB double-buffered
                                           # (safe on v5e/v6e/v7x, >=85% HBM roofline)


def _choose_lane(n):
    """Pick the widest lane width that divides n (avoids pad/slice copies)."""
    for lane in _LANE_CANDIDATES:
        if n % lane == 0:
            return lane
    return None


def _choose_tile_rows(rows, cols, itemsize):
    """Pick a row-tile giving ~_TARGET_BLOCK_BYTES per block.

    Tile rows are a multiple of 32 (safe sublane packing for f32/bf16/int8)
    unless the whole slab is small, in which case the full extent is used
    (block_shape == full array dims is always legal).
    """
    if rows <= 32:
        return rows
    t = max(1, _TARGET_BLOCK_BYTES // (cols * itemsize))
    t = (t // 32) * 32
    t = max(32, min(t, (rows // 32) * 32))
    return int(t)


# ---------------------------------------------------------------------------
# pallas_call wrapper
# ---------------------------------------------------------------------------
def _round_pallas_2d(x2d, tile_rows):
    rows, cols = x2d.shape
    grid = (pl.cdiv(rows, tile_rows),)

    block_bytes = tile_rows * cols * x2d.dtype.itemsize
    # 2 streams (in + out) x 2 buffers each, plus headroom.  32 MiB floor keeps
    # the compiler's own scratch comfortable; stays within v7x's 64 MiB VMEM.
    vmem_limit = int(min(max(32 << 20, 4 * block_bytes + (4 << 20)), 100 << 20))

    return pl.pallas_call(
        _round_kernel,
        out_shape=jax.ShapeDtypeStruct((rows, cols), x2d.dtype),
        grid=grid,
        in_specs=[pl.BlockSpec((tile_rows, cols), lambda i: (i, 0))],
        out_specs=pl.BlockSpec((tile_rows, cols), lambda i: (i, 0)),
        compiler_params=pltpu.CompilerParams(
            # "parallel" lets the grid shard across the 2 TensorCores on v7x;
            # harmless (measured ~0% delta) on single-TC v5e/v6e.
            dimension_semantics=("parallel",),
            vmem_limit_bytes=vmem_limit,
        ),
    )(x2d)


# ---------------------------------------------------------------------------
# Forward implementation (no pad/slice on the aligned hot path)
# ---------------------------------------------------------------------------
def _quantize_impl(x):
    orig_shape = x.shape
    n = x.size
    if n == 0:
        return x

    flat = jnp.ravel(x)
    lane = _choose_lane(n)

    if lane is not None:
        # Hot path: element count divides a lane width -> pure reshape, no copies.
        x2d = flat.reshape(-1, lane)
        tile_rows = _choose_tile_rows(x2d.shape[0], lane, x2d.dtype.itemsize)
        y2d = _round_pallas_2d(x2d, tile_rows)
        return y2d.reshape(orig_shape)

    # Ragged fallback (rare): pad the tail to a multiple of 128 lanes, then trim.
    lane = 128
    padded = ((n + lane - 1) // lane) * lane
    flat = jnp.pad(flat, (0, padded - n))
    x2d = flat.reshape(-1, lane)
    tile_rows = _choose_tile_rows(x2d.shape[0], lane, x2d.dtype.itemsize)
    y2d = _round_pallas_2d(x2d, tile_rows)
    return y2d.reshape(-1)[:n].reshape(orig_shape)


# ---------------------------------------------------------------------------
# custom_vjp: straight-through estimator (matches the PyTorch autograd.Function)
# ---------------------------------------------------------------------------
@jax.custom_vjp
def differentiable_quantize(x):
    """Forward: round(x). Backward: identity (straight-through) gradient."""
    return _quantize_impl(x)


def _dq_fwd(x):
    return _quantize_impl(x), None


def _dq_bwd(_, g):
    # grad_input = grad_output (identity STE, same as grad_output.clone()).
    return (g,)


differentiable_quantize.defvjp(_dq_fwd, _dq_bwd)


class DifferentiableQuantize:
    """JAX/Pallas equivalent of the PyTorch DifferentiableQuantize module."""

    def __call__(self, x):
        return differentiable_quantize(x)


# ---------------------------------------------------------------------------
# Self-test
# ---------------------------------------------------------------------------
if __name__ == "__main__":
    key = jax.random.PRNGKey(0)
    # NCHW input, small shapes (n = 2*4*16*16 = 2048, divisible by 1024 -> hot path)
    x = jax.random.normal(key, (2, 4, 16, 16), dtype=jnp.float32) * 3.0

    mod = DifferentiableQuantize()
    y = mod(x)
    y = jax.block_until_ready(y)

    # Correctness check against plain JAX round
    ref = jnp.round(x)
    assert y.shape == x.shape
    assert jnp.array_equal(y, ref), "mismatch vs jnp.round"

    # Check the straight-through gradient
    g = jax.grad(lambda t: jnp.sum(differentiable_quantize(t) * 2.0))(x)
    g = jax.block_until_ready(g)
    assert jnp.allclose(g, 2.0 * jnp.ones_like(x)), "STE gradient mismatch"

    # Exercise a larger, multi-block case (grid > 1) for the tiled path
    x_big = jax.random.normal(jax.random.PRNGKey(1), (4, 64, 64, 64), jnp.float32) * 5.0
    y_big = jax.block_until_ready(mod(x_big))
    assert jnp.array_equal(y_big, jnp.round(x_big)), "mismatch on large input"

    print("KERNEL_OK")
</pallas_src>

<mosaic_0001>
module attributes {stable_mosaic.version = 11 : i64} {
  func.func @_round_kernel(%arg0: i32, %arg1: memref<2x1024xf32, #tpu.memory_space<vmem>>, %arg2: memref<2x1024xf32, #tpu.memory_space<vmem>>) attributes {dimension_semantics = [#tpu.dimension_semantics<parallel>], iteration_bounds = array<i64: 1>, scalar_prefetch = 0 : i64, scratch_operands = 0 : i64, tpu.core_type = #tpu.core_type<tc>, window_params = [{transform_indices = @transform_0, window_bounds = array<i64: 2, 1024>}, {transform_indices = @transform_1, window_bounds = array<i64: 2, 1024>}]} {
    %c0 = arith.constant 0 : index
    %c0_0 = arith.constant 0 : index
    %0 = vector.load %arg1[%c0, %c0_0] : memref<2x1024xf32, #tpu.memory_space<vmem>>, vector<2x1024xf32>
    %1 = math.roundeven %0 : vector<2x1024xf32>
    %c0_1 = arith.constant 0 : index
    %c0_2 = arith.constant 0 : index
    %2 = vector.load %arg2[%c0_1, %c0_2] : memref<2x1024xf32, #tpu.memory_space<vmem>>, vector<2x1024xf32>
    tpu.vector_store %arg2[%c0_1, %c0_2], %1 {strides = array<i32>} : memref<2x1024xf32, #tpu.memory_space<vmem>>, vector<2x1024xf32>,
    return
  }
  func.func @transform_0(%arg0: i32) -> (i32, i32) {
    %c0_i32 = arith.constant 0 : i32
    %c0_i32_0 = arith.constant 0 : i32
    return %arg0, %c0_i32 : i32, i32
  }
  func.func @transform_1(%arg0: i32) -> (i32, i32) {
    %c0_i32 = arith.constant 0 : i32
    %c0_i32_0 = arith.constant 0 : i32
    return %arg0, %c0_i32 : i32, i32
  }
}

</mosaic_0001>

<llo_original>
// kernel: tpu_custom_call.1
$region0: #{tpu_custom_call.1}
  #allocation0 [shape = 'u32[]', space=smem, size = 0x4, offset = 0x4, fixed_abs, tag = 'smem constant byte address 0x4 - core index']
  #allocation1 [shape = 'u32[144,128]{1,0:T(1,128)}', space=vmem, size = 0x12000, scoped, tag = 'internal scratch']
  %s0 = inlined_call_operand.hbm [shape: f32[2,1024], index: 0, kind: input, shape index: {}]
  %s1 = inlined_call_operand.hbm [shape: f32[2,1024], index: 1, kind: output, shape index: {}]
  %s2 = sld [smem:[#allocation0]]
  $region18: #{tpu_custom_call.1} parent=0
    _
  %s4 = ssub.s32 1, %s2
  %s5 = scalar_select 0, %s4, %s2
  $region1: #{tpu_custom_call.1} parent=0
    #allocation2 [shape = 'u8[8192]{0}', space=vmem, size = 0x2000, scoped, tag = 'input window, operand 0, single buffered']
    #allocation3 [shape = 's32[1]{0}', space=sflag, size = 0x4, scoped, tag = 'scoped memory for tpu_custom_call.1']
    #allocation4 [shape = 's32[1]{0}', space=sflag, size = 0x4, scoped, tag = 'scoped memory for tpu_custom_call.1']
    #allocation5 [shape = 'u8[8192]{0}', space=vmem, size = 0x2000, scoped, tag = 'output window, operand 0, single buffered']
    %6 = vsyncpa [#allocation3], 0
    %7 = vsyncpa [#allocation4], 0
    // Predicated region
    $region2: #{tpu_custom_call.1} parent=1 // pred_check
      _
    $region3: #{tpu_custom_call.1} parent=1 // pred_check_branch
      %9 = sbr.rel (0) target = $region5
    $region4: #{tpu_custom_call.1} parent=1 // pred_region
      %s11 = ssub.s32 256, 256
      %12 = vsyncadd [#allocation3], %s11
      %s14 = sshll.u32 [#allocation2], 4
      %s15 = int_to_ptr.vmem [resolvable:$true] %s14
      %17 = dma.hbm_to_vmem [thread:$0]  %s0, 256, %s15, [#allocation3]
    $region5: #{tpu_custom_call.1} parent=1 // pred_fallthru
      _
    // Predicated region
    $region6: #{tpu_custom_call.1} parent=1 // pred_check
      _
    $region7: #{tpu_custom_call.1} parent=1 // pred_check_branch
      %19 = sbr.rel (0) target = $region9
    $region8: #{tpu_custom_call.1} parent=1 // pred_region
      %20 = dma.done [#allocation3], 256
    $region9: #{tpu_custom_call.1} parent=1 // pred_fallthru
      _
    %v21 = vld [vmem:[#allocation2] sm:$0xff]
    %v22 = vld [vmem:[#allocation2 + $0x8] sm:$0xff]
    %v23 = vround.ne.pseudo %v21
    %v24 = vround.ne.pseudo %v22
    %25 = vst [vmem:[#allocation5] sm:$0xff] %v23
    %26 = vst [vmem:[#allocation5 + $0x8] sm:$0xff] %v24
    // Predicated region
    $region10: #{tpu_custom_call.1} parent=1 // pred_check
      _
    $region11: #{tpu_custom_call.1} parent=1 // pred_check_branch
      %28 = sbr.rel (0) target = $region13
    $region12: #{tpu_custom_call.1} parent=1 // pred_region
      %s30 = ssub.s32 256, 256
      %31 = vsyncadd [#allocation4], %s30
      %s33 = sshll.u32 [#allocation5], 4
      %s34 = int_to_ptr.vmem [resolvable:$true] %s33
      %36 = dma.vmem_to_hbm [thread:$0]  %s34, 256, %s1, [#allocation4]
    $region13: #{tpu_custom_call.1} parent=1 // pred_fallthru
      _
    // Predicated region
    $region14: #{tpu_custom_call.1} parent=1 // pred_check
      _
    $region15: #{tpu_custom_call.1} parent=1 // pred_check_branch
      %38 = sbr.rel (0) target = $region17
    $region16: #{tpu_custom_call.1} parent=1 // pred_region
      %39 = dma.done [#allocation4], 256
    $region17: #{tpu_custom_call.1} parent=1 // pred_fallthru
      _
    %40 = vsyncpa [#allocation3], 1
    %41 = vsyncpa [#allocation4], 1

</llo_original>
